<compile_context>
chip_gen: v5e
topology: v5e:2x2
jax: 0.10.0
libtpu: 0.0.40
codegen_flags: <defaults>
</compile_context>

<pallas_src>
import math

import jax
import jax.numpy as jnp
from jax.experimental import pallas as pl
from jax.experimental.pallas import tpu as pltpu


def _round_up(x: int, m: int) -> int:
    return ((x + m - 1) // m) * m


# ----------------------------------------------------------------------------
# Embedding table (same math as DiffusionEmbedding._build_embedding)
# ----------------------------------------------------------------------------
def build_embedding(max_steps: int) -> jnp.ndarray:
    steps = jnp.arange(max_steps, dtype=jnp.float32)[:, None]          # (T, 1)
    dims = jnp.arange(64, dtype=jnp.float32)[None, :]                  # (1, 64)
    table = steps * 10.0 ** (dims * 4.0 / 63.0)                        # (T, 64)
    # torch.view_as_real(torch.exp(1j * table)) -> (..., 64, 2) = (cos, sin),
    # then .view(T, 128) interleaves cos/sin.
    emb = jnp.stack([jnp.cos(table), jnp.sin(table)], axis=-1)         # (T, 64, 2)
    return emb.reshape(max_steps, 128)                                 # (T, 128)


# ----------------------------------------------------------------------------
# Fused kernel: table lookup / lerp -> Linear -> SiLU -> Linear -> SiLU
# ----------------------------------------------------------------------------
def _fused_kernel(t_ref, emb_ref, w1_ref, b1_ref, w2_ref, b2_ref, o_ref):
    tb = t_ref.shape[0]            # batch tile
    t_rows = emb_ref.shape[0]      # padded table rows

    # ---- embedding gather + linear interpolation, done on the MXU ----------
    # t is the continuous table coordinate (already scaled by (T-1) for the
    # float path; equal to the integer step for the int path).
    t = t_ref[...]                                              # (TB, 1) f32
    low = jnp.floor(t)
    frac = t - low                                              # in [0, 1)
    low_i = low.astype(jnp.int32)
    high_i = jnp.ceil(t).astype(jnp.int32)
    row_ids = jax.lax.broadcasted_iota(jnp.int32, (tb, t_rows), 1)
    # Lerp-weight matrix: row b has (1-frac) at low_i[b] and frac at high_i[b]
    # (exactly 1.0 at low_i when frac == 0, i.e. the integer-step path).
    sel = (jnp.where(row_ids == low_i, 1.0 - frac, 0.0)
           + jnp.where(row_ids == high_i, frac, 0.0))           # (TB, T) f32
    x = jnp.dot(sel, emb_ref[...],
                preferred_element_type=jnp.float32)             # (TB, 128) f32

    # ---- projection1 -> SiLU -> projection2 -> SiLU (bf16 weights) ---------
    h = jnp.dot(x.astype(jnp.bfloat16), w1_ref[...],
                preferred_element_type=jnp.float32) + b1_ref[...]
    h = h * jax.nn.sigmoid(h)                                   # SiLU
    y = jnp.dot(h.astype(jnp.bfloat16), w2_ref[...],
                preferred_element_type=jnp.float32) + b2_ref[...]
    y = y * jax.nn.sigmoid(y)                                   # SiLU
    o_ref[...] = y.astype(o_ref.dtype)


def _fused_pallas_call(t_scaled, emb_padded, w1_bf, b1, w2_bf, b2, *, tb):
    b_pad = t_scaled.shape[0]
    t_rows = emb_padded.shape[0]
    grid = (b_pad // tb,)
    grid_spec = pltpu.PrefetchScalarGridSpec(
        num_scalar_prefetch=0,
        grid=grid,
        in_specs=[
            pl.BlockSpec((tb, 1), lambda i: (i, 0)),         # t (scaled step)
            pl.BlockSpec((t_rows, 128), lambda i: (0, 0)),   # embedding table
            pl.BlockSpec((128, 512), lambda i: (0, 0)),      # W1^T (bf16), resident
            pl.BlockSpec((1, 512), lambda i: (0, 0)),        # b1
            pl.BlockSpec((512, 512), lambda i: (0, 0)),      # W2^T (bf16), resident
            pl.BlockSpec((1, 512), lambda i: (0, 0)),        # b2
        ],
        out_specs=pl.BlockSpec((tb, 512), lambda i: (i, 0)),
    )
    return pl.pallas_call(
        _fused_kernel,
        out_shape=jax.ShapeDtypeStruct((b_pad, 512), jnp.float32),
        grid_spec=grid_spec,
        compiler_params=pltpu.CompilerParams(
            dimension_semantics=("parallel",)),
    )(t_scaled, emb_padded, w1_bf, b1, w2_bf, b2)


# ----------------------------------------------------------------------------
# Full forward (index math in XLA, everything else fused in one pallas_call)
# ----------------------------------------------------------------------------
@jax.jit
def diffusion_embedding_forward(diffusion_step, embedding, w1_t, b1, w2_t, b2):
    """diffusion_step: (B,) int step indices, or float in [0, 1] (lerp path)."""
    num_steps = embedding.shape[0]
    batch = diffusion_step.shape[0]

    # Continuous table coordinate (tiny elementwise op on (B,)).
    if jnp.issubdtype(diffusion_step.dtype, jnp.floating):
        t = diffusion_step.astype(jnp.float32) * (num_steps - 1)   # _lerp_embedding
    else:
        t = diffusion_step.astype(jnp.float32)                     # exact for T < 2^24

    # Batch tiling: TB = 256 (good M tile for v6e/v7x MXU, multiple of 128 for
    # v5e) once the batch is large; otherwise the whole (8-aligned) batch.
    tb = 256 if batch >= 256 else _round_up(batch, 8)
    b_pad = _round_up(batch, tb)
    t = jnp.pad(t, (0, b_pad - batch)).reshape(b_pad, 1)

    # Pad table rows to a lane-aligned multiple (padded rows are never selected).
    t_rows = _round_up(num_steps, 128)
    emb_padded = jnp.pad(embedding.astype(jnp.float32),
                         ((0, t_rows - num_steps), (0, 0)))

    # Weights in bf16 (no-op converts if already pre-cast by the caller).
    w1_bf = w1_t.astype(jnp.bfloat16)
    w2_bf = w2_t.astype(jnp.bfloat16)
    b1_ = jnp.asarray(b1, jnp.float32).reshape(1, 512)
    b2_ = jnp.asarray(b2, jnp.float32).reshape(1, 512)

    out = _fused_pallas_call(t, emb_padded, w1_bf, b1_, w2_bf, b2_, tb=tb)
    return out[:batch]


# ----------------------------------------------------------------------------
# References for correctness checking
# ----------------------------------------------------------------------------
def _matched_reference(diffusion_step, embedding, w1_bf, b1, w2_bf, b2):
    """Same numerics as the kernel: bf16 weights/activations, f32 accumulation."""
    num_steps = embedding.shape[0]
    if jnp.issubdtype(diffusion_step.dtype, jnp.floating):
        t = diffusion_step.astype(jnp.float32) * (num_steps - 1)
    else:
        t = diffusion_step.astype(jnp.float32)
    low = jnp.floor(t)
    frac = (t - low)[:, None]
    low_i = low.astype(jnp.int32)
    high_i = jnp.ceil(t).astype(jnp.int32)
    x = embedding[low_i] * (1.0 - frac) + embedding[high_i] * frac
    h = jnp.dot(x.astype(jnp.bfloat16), w1_bf.astype(jnp.bfloat16),
                preferred_element_type=jnp.float32) + b1.reshape(1, -1)
    h = h * jax.nn.sigmoid(h)
    y = jnp.dot(h.astype(jnp.bfloat16), w2_bf.astype(jnp.bfloat16),
                preferred_element_type=jnp.float32) + b2.reshape(1, -1)
    return y * jax.nn.sigmoid(y)


def _module_reference(diffusion_step, embedding, w1_t, b1, w2_t, b2):
    """Full-f32 reference matching the PyTorch module math."""
    if jnp.issubdtype(diffusion_step.dtype, jnp.floating):
        t = diffusion_step * (embedding.shape[0] - 1)
        low_idx = jnp.floor(t).astype(jnp.int32)
        high_idx = jnp.ceil(t).astype(jnp.int32)
        x = embedding[low_idx] + (embedding[high_idx] - embedding[low_idx]) * \
            (t - low_idx.astype(t.dtype))[:, None]
    else:
        x = embedding[diffusion_step]
    h = x @ w1_t + b1.reshape(1, -1)
    h = h * jax.nn.sigmoid(h)
    y = h @ w2_t + b2.reshape(1, -1)
    return y * jax.nn.sigmoid(y)


if __name__ == "__main__":
    max_steps = 50
    B = 8

    key = jax.random.PRNGKey(0)
    k1, k2, k3, k4, k5, k6 = jax.random.split(key, 6)

    # Deterministic parameter init (PyTorch nn.Linear-style uniform bounds).
    bound1 = 1.0 / math.sqrt(128)
    bound2 = 1.0 / math.sqrt(512)
    w1_t = jax.random.uniform(k1, (128, 512), jnp.float32, -bound1, bound1)
    b1 = jax.random.uniform(k2, (1, 512), jnp.float32, -bound1, bound1)
    w2_t = jax.random.uniform(k3, (512, 512), jnp.float32, -bound2, bound2)
    b2 = jax.random.uniform(k4, (1, 512), jnp.float32, -bound2, bound2)

    # Pre-cast projection weights to bf16 once; weight DMA dominates this kernel.
    w1_bf = w1_t.astype(jnp.bfloat16)
    w2_bf = w2_t.astype(jnp.bfloat16)

    embedding = build_embedding(max_steps + 1)                          # (51, 128)

    # --- integer-step path ----------------------------------------------------
    steps_int = jax.random.randint(k5, (B,), 0, max_steps + 1, dtype=jnp.int32)
    out_int = diffusion_embedding_forward(steps_int, embedding, w1_bf, b1, w2_bf, b2)
    jax.block_until_ready(out_int)
    assert out_int.shape == (B, 512)
    ref_int = _matched_reference(steps_int, embedding, w1_bf, b1, w2_bf, b2)
    assert jnp.allclose(out_int, ref_int, atol=1e-2, rtol=1e-2), \
        float(jnp.max(jnp.abs(out_int - ref_int)))
    ref_int_f32 = _module_reference(steps_int, embedding, w1_t, b1, w2_t, b2)
    assert jnp.allclose(out_int, ref_int_f32, atol=3e-2, rtol=3e-2), \
        float(jnp.max(jnp.abs(out_int - ref_int_f32)))

    # --- float-step (lerp) path -------------------------------------------------
    steps_f = jax.random.uniform(k6, (B,), jnp.float32, 0.0, 1.0)
    out_f = diffusion_embedding_forward(steps_f, embedding, w1_bf, b1, w2_bf, b2)
    jax.block_until_ready(out_f)
    assert out_f.shape == (B, 512)
    ref_f = _matched_reference(steps_f, embedding, w1_bf, b1, w2_bf, b2)
    assert jnp.allclose(out_f, ref_f, atol=1e-2, rtol=1e-2), \
        float(jnp.max(jnp.abs(out_f - ref_f)))
    ref_f_f32 = _module_reference(steps_f, embedding, w1_t, b1, w2_t, b2)
    assert jnp.allclose(out_f, ref_f_f32, atol=3e-2, rtol=3e-2), \
        float(jnp.max(jnp.abs(out_f - ref_f_f32)))

    print("KERNEL_OK")
</pallas_src>

<mosaic_0001>
module attributes {stable_mosaic.version = 11 : i64} {
  func.func @_fused_kernel(%arg0: i32, %arg1: memref<8x1xf32, #tpu.memory_space<vmem>>, %arg2: memref<128x128xf32, #tpu.memory_space<vmem>>, %arg3: memref<128x512xbf16, #tpu.memory_space<vmem>>, %arg4: memref<1x512xf32, #tpu.memory_space<vmem>>, %arg5: memref<512x512xbf16, #tpu.memory_space<vmem>>, %arg6: memref<1x512xf32, #tpu.memory_space<vmem>>, %arg7: memref<8x512xf32, #tpu.memory_space<vmem>>) attributes {dimension_semantics = [#tpu.dimension_semantics<parallel>], iteration_bounds = array<i64: 1>, scalar_prefetch = 0 : i64, scratch_operands = 0 : i64, tpu.core_type = #tpu.core_type<tc>, window_params = [{transform_indices = @transform_0, window_bounds = array<i64: 8, 1>}, {pipeline_mode = #tpu.pipeline_mode<synchronous>, transform_indices = @transform_1, window_bounds = array<i64: 128, 128>}, {pipeline_mode = #tpu.pipeline_mode<synchronous>, transform_indices = @transform_2, window_bounds = array<i64: 128, 512>}, {pipeline_mode = #tpu.pipeline_mode<synchronous>, transform_indices = @transform_3, window_bounds = array<i64: 1, 512>}, {pipeline_mode = #tpu.pipeline_mode<synchronous>, transform_indices = @transform_4, window_bounds = array<i64: 512, 512>}, {pipeline_mode = #tpu.pipeline_mode<synchronous>, transform_indices = @transform_5, window_bounds = array<i64: 1, 512>}, {transform_indices = @transform_6, window_bounds = array<i64: 8, 512>}]} {
    %c0 = arith.constant 0 : index
    %c0_0 = arith.constant 0 : index
    %0 = vector.load %arg1[%c0, %c0_0] : memref<8x1xf32, #tpu.memory_space<vmem>>, vector<8x1xf32>
    %1 = math.floor %0 : vector<8x1xf32>
    %2 = arith.subf %0, %1 : vector<8x1xf32>
    %3 = arith.fptosi %1 : vector<8x1xf32> to vector<8x1xi32>
    %4 = math.ceil %0 : vector<8x1xf32>
    %5 = arith.fptosi %4 : vector<8x1xf32> to vector<8x1xi32>
    %6 = tpu.iota {dimensions = array<i32: 1>} : vector<8x128xi32>
    %7 = vector.broadcast %3 : vector<8x1xi32> to vector<8x128xi32>
    %8 = arith.cmpi eq, %6, %7 : vector<8x128xi32>
    %cst = arith.constant 1.000000e+00 : f32
    %9 = vector.broadcast %cst : f32 to vector<8x1xf32>
    %10 = arith.subf %9, %2 : vector<8x1xf32>
    %cst_1 = arith.constant 0.000000e+00 : f32
    %11 = vector.shape_cast %10 : vector<8x1xf32> to vector<8x1xf32>
    %12 = vector.broadcast %11 : vector<8x1xf32> to vector<8x128xf32>
    %13 = vector.broadcast %cst_1 : f32 to vector<8x128xf32>
    %14 = arith.select %8, %12, %13 : vector<8x128xi1>, vector<8x128xf32>
    %15 = vector.broadcast %5 : vector<8x1xi32> to vector<8x128xi32>
    %16 = arith.cmpi eq, %6, %15 : vector<8x128xi32>
    %cst_2 = arith.constant 0.000000e+00 : f32
    %17 = vector.shape_cast %2 : vector<8x1xf32> to vector<8x1xf32>
    %18 = vector.broadcast %17 : vector<8x1xf32> to vector<8x128xf32>
    %19 = vector.broadcast %cst_2 : f32 to vector<8x128xf32>
    %20 = arith.select %16, %18, %19 : vector<8x128xi1>, vector<8x128xf32>
    %21 = arith.addf %14, %20 : vector<8x128xf32>
    %c0_3 = arith.constant 0 : index
    %c0_4 = arith.constant 0 : index
    %22 = vector.load %arg2[%c0_3, %c0_4] : memref<128x128xf32, #tpu.memory_space<vmem>>, vector<128x128xf32>
    %cst_5 = arith.constant dense<0.000000e+00> : vector<8x128xf32>
    %23 = tpu.matmul %21, %22, %cst_5 {dimension_numbers = #tpu.dot_dimension_numbers<[1], [0], [0], [1], [0, 0, 1, 1], [], []>} : vector<8x128xf32>, vector<128x128xf32>, vector<8x128xf32> -> vector<8x128xf32>
    %24 = arith.truncf %23 : vector<8x128xf32> to vector<8x128xbf16>
    %c0_6 = arith.constant 0 : index
    %c0_7 = arith.constant 0 : index
    %25 = vector.load %arg3[%c0_6, %c0_7] : memref<128x512xbf16, #tpu.memory_space<vmem>>, vector<128x512xbf16>
    %cst_8 = arith.constant dense<0.000000e+00> : vector<8x512xf32>
    %26 = tpu.matmul %24, %25, %cst_8 {dimension_numbers = #tpu.dot_dimension_numbers<[1], [0], [0], [1], [0, 0, 1, 1], [], []>} : vector<8x128xbf16>, vector<128x512xbf16>, vector<8x512xf32> -> vector<8x512xf32>
    %c0_9 = arith.constant 0 : index
    %c0_10 = arith.constant 0 : index
    %27 = vector.load %arg4[%c0_9, %c0_10] : memref<1x512xf32, #tpu.memory_space<vmem>>, vector<1x512xf32>
    %28 = vector.broadcast %27 : vector<1x512xf32> to vector<8x512xf32>
    %29 = arith.addf %26, %28 : vector<8x512xf32>
    %30 = arith.negf %29 : vector<8x512xf32>
    %31 = math.exp %30 : vector<8x512xf32>
    %cst_11 = arith.constant 1.000000e+00 : f32
    %32 = vector.broadcast %cst_11 : f32 to vector<8x512xf32>
    %33 = arith.addf %32, %31 : vector<8x512xf32>
    %34 = arith.divf %32, %33 : vector<8x512xf32>
    %35 = arith.mulf %29, %34 : vector<8x512xf32>
    %36 = arith.truncf %35 : vector<8x512xf32> to vector<8x512xbf16>
    %c0_12 = arith.constant 0 : index
    %c0_13 = arith.constant 0 : index
    %37 = vector.load %arg5[%c0_12, %c0_13] : memref<512x512xbf16, #tpu.memory_space<vmem>>, vector<512x512xbf16>
    %cst_14 = arith.constant dense<0.000000e+00> : vector<8x512xf32>
    %38 = tpu.matmul %36, %37, %cst_14 {dimension_numbers = #tpu.dot_dimension_numbers<[1], [0], [0], [1], [0, 0, 1, 1], [], []>} : vector<8x512xbf16>, vector<512x512xbf16>, vector<8x512xf32> -> vector<8x512xf32>
    %c0_15 = arith.constant 0 : index
    %c0_16 = arith.constant 0 : index
    %39 = vector.load %arg6[%c0_15, %c0_16] : memref<1x512xf32, #tpu.memory_space<vmem>>, vector<1x512xf32>
    %40 = vector.broadcast %39 : vector<1x512xf32> to vector<8x512xf32>
    %41 = arith.addf %38, %40 : vector<8x512xf32>
    %42 = arith.negf %41 : vector<8x512xf32>
    %43 = math.exp %42 : vector<8x512xf32>
    %cst_17 = arith.constant 1.000000e+00 : f32
    %44 = vector.broadcast %cst_17 : f32 to vector<8x512xf32>
    %45 = arith.addf %44, %43 : vector<8x512xf32>
    %46 = arith.divf %44, %45 : vector<8x512xf32>
    %47 = arith.mulf %41, %46 : vector<8x512xf32>
    %c0_18 = arith.constant 0 : index
    %c0_19 = arith.constant 0 : index
    %48 = vector.load %arg7[%c0_18, %c0_19] : memref<8x512xf32, #tpu.memory_space<vmem>>, vector<8x512xf32>
    tpu.vector_store %arg7[%c0_18, %c0_19], %47 {strides = array<i32>} : memref<8x512xf32, #tpu.memory_space<vmem>>, vector<8x512xf32>,
    return
  }
  func.func @transform_0(%arg0: i32) -> (i32, i32) {
    %c0_i32 = arith.constant 0 : i32
    %c0_i32_0 = arith.constant 0 : i32
    return %arg0, %c0_i32 : i32, i32
  }
  func.func @transform_1(%arg0: i32) -> (i32, i32) {
    %c0_i32 = arith.constant 0 : i32
    %c0_i32_0 = arith.constant 0 : i32
    %c0_i32_1 = arith.constant 0 : i32
    return %c0_i32, %c0_i32_0 : i32, i32
  }
  func.func @transform_2(%arg0: i32) -> (i32, i32) {
    %c0_i32 = arith.constant 0 : i32
    %c0_i32_0 = arith.constant 0 : i32
    %c0_i32_1 = arith.constant 0 : i32
    return %c0_i32, %c0_i32_0 : i32, i32
  }
  func.func @transform_3(%arg0: i32) -> (i32, i32) {
    %c0_i32 = arith.constant 0 : i32
    %c0_i32_0 = arith.constant 0 : i32
    %c0_i32_1 = arith.constant 0 : i32
    return %c0_i32, %c0_i32_0 : i32, i32
  }
  func.func @transform_4(%arg0: i32) -> (i32, i32) {
    %c0_i32 = arith.constant 0 : i32
    %c0_i32_0 = arith.constant 0 : i32
    %c0_i32_1 = arith.constant 0 : i32
    return %c0_i32, %c0_i32_0 : i32, i32
  }
  func.func @transform_5(%arg0: i32) -> (i32, i32) {
    %c0_i32 = arith.constant 0 : i32
    %c0_i32_0 = arith.constant 0 : i32
    %c0_i32_1 = arith.constant 0 : i32
    return %c0_i32, %c0_i32_0 : i32, i32
  }
  func.func @transform_6(%arg0: i32) -> (i32, i32) {
    %c0_i32 = arith.constant 0 : i32
    %c0_i32_0 = arith.constant 0 : i32
    return %arg0, %c0_i32 : i32, i32
  }
}

</mosaic_0001>

<llo_original>
// kernel: diffusion_embedding_forward.1
$region0: #{diffusion_embedding_forward.1}
  #allocation0 [shape = 'u32[]', space=smem, size = 0x4, offset = 0x4, fixed_abs, tag = 'smem constant byte address 0x4 - core index']
  #allocation1 [shape = 'u32[72,128]{1,0:T(1,128)}', space=vmem, size = 0x9000, scoped, tag = 'internal scratch']
  %s0 = inlined_call_operand.vmem [shape: f32[8,1], index: 0, kind: input, shape index: {}]
  %s1 = inlined_call_operand.vmem [shape: f32[128,128], index: 1, kind: input, shape index: {}]
  %s2 = inlined_call_operand.hbm [shape: bf16[128,512], index: 2, kind: input, shape index: {}]
  %s3 = inlined_call_operand.vmem [shape: f32[1,512], index: 3, kind: input, shape index: {}]
  %s4 = inlined_call_operand.hbm [shape: bf16[512,512], index: 4, kind: input, shape index: {}]
  %s5 = inlined_call_operand.vmem [shape: f32[1,512], index: 5, kind: input, shape index: {}]
  %s6 = inlined_call_operand.hbm [shape: f32[8,512], index: 6, kind: output, shape index: {}]
  %s7 = sld [smem:[#allocation0]]
  $region42: #{diffusion_embedding_forward.1} parent=0
    _
  %s9 = ssub.s32 1, %s7
  %s10 = scalar_select 0, %s9, %s7
  $region1: #{diffusion_embedding_forward.1} parent=0
    #allocation2 [shape = 'u8[131072]{0}', space=vmem, size = 0x20000, scoped, tag = 'input window, operand 2, single buffered']
    #allocation3 [shape = 's32[1]{0}', space=sflag, size = 0x4, scoped, tag = 'scoped memory for diffusion_embedding_forward.1']
    #allocation4 [shape = 's32[1]{0}', space=sflag, size = 0x4, scoped, tag = 'scoped memory for diffusion_embedding_forward.1']
    #allocation5 [shape = 'u8[524288]{0}', space=vmem, size = 0x80000, scoped, tag = 'input window, operand 4, single buffered']
    #allocation6 [shape = 's32[1]{0}', space=sflag, size = 0x4, scoped, tag = 'scoped memory for diffusion_embedding_forward.1']
    #allocation7 [shape = 'u8[16384]{0}', space=vmem, size = 0x4000, scoped, tag = 'output window, operand 0, single buffered']
    %11 = vsyncpa [#allocation3], 0
    %12 = vsyncpa [#allocation6], 0
    %13 = vsyncpa [#allocation4], 0
    // Predicated region
    $region2: #{diffusion_embedding_forward.1} parent=1 // pred_check
      _
    $region3: #{diffusion_embedding_forward.1} parent=1 // pred_check_branch
      %15 = sbr.rel (0) target = $region5
    $region4: #{diffusion_embedding_forward.1} parent=1 // pred_region
      _
    $region5: #{diffusion_embedding_forward.1} parent=1 // pred_fallthru
      _
    // Predicated region
    $region6: #{diffusion_embedding_forward.1} parent=1 // pred_check
      _
    $region7: #{diffusion_embedding_forward.1} parent=1 // pred_check_branch
      %17 = sbr.rel (0) target = $region9
    $region8: #{diffusion_embedding_forward.1} parent=1 // pred_region
      _
    $region9: #{diffusion_embedding_forward.1} parent=1 // pred_fallthru
      _
    // Predicated region
    $region10: #{diffusion_embedding_forward.1} parent=1 // pred_check
      _
    $region11: #{diffusion_embedding_forward.1} parent=1 // pred_check_branch
      %19 = sbr.rel (0) target = $region13
    $region12: #{diffusion_embedding_forward.1} parent=1 // pred_region
      %21 = vsyncadd [#allocation3], 0
      %s22 = sshll.u32 %s2, 4
      %s23 = int_to_ptr.hbm [resolvable:$true] %s22
      %s24 = sshll.u32 [#allocation2], 4
      %s25 = int_to_ptr.vmem [resolvable:$true] %s24
      %30 = dma.hbm_to_vmem [thread:$0]  %s23, 4096, %s25, [#allocation3], 256, 256, 16
    $region13: #{diffusion_embedding_forward.1} parent=1 // pred_fallthru
      _
    // Predicated region
    $region14: #{diffusion_embedding_forward.1} parent=1 // pred_check
      _
    $region15: #{diffusion_embedding_forward.1} parent=1 // pred_check_branch
      %32 = sbr.rel (0) target = $region17
    $region16: #{diffusion_embedding_forward.1} parent=1 // pred_region
      _
    $region17: #{diffusion_embedding_forward.1} parent=1 // pred_fallthru
      _
    // Predicated region
    $region18: #{diffusion_embedding_forward.1} parent=1 // pred_check
      _
    $region19: #{diffusion_embedding_forward.1} parent=1 // pred_check_branch
      %34 = sbr.rel (0) target = $region21
    $region20: #{diffusion_embedding_forward.1} parent=1 // pred_region
      %36 = vsyncadd [#allocation6], 0
      %s37 = sshll.u32 %s4, 4
      %s38 = int_to_ptr.hbm [resolvable:$true] %s37
      %s39 = sshll.u32 [#allocation5], 4
      %s40 = int_to_ptr.vmem [resolvable:$true] %s39
      %45 = dma.hbm_to_vmem [thread:$0]  %s38, 16384, %s40, [#allocation6], 256, 256, 16
    $region21: #{diffusion_embedding_forward.1} parent=1 // pred_fallthru
      _
    // Predicated region
    $region22: #{diffusion_embedding_forward.1} parent=1 // pred_check
      _
    $region23: #{diffusion_embedding_forward.1} parent=1 // pred_check_branch
      %47 = sbr.rel (0) target = $region25
    $region24: #{diffusion_embedding_forward.1} parent=1 // pred_region
      _
    $region25: #{diffusion_embedding_forward.1} parent=1 // pred_fallthru
      _
    // Predicated region
    $region26: #{diffusion_embedding_forward.1} parent=1 // pred_check
      _
    $region27: #{diffusion_embedding_forward.1} parent=1 // pred_check_branch
      %49 = sbr.rel (0) target = $region29
    $region28: #{diffusion_embedding_forward.1} parent=1 // pred_region
      %51 = dma.done [#allocation3], 4096
    $region29: #{diffusion_embedding_forward.1} parent=1 // pred_fallthru
      _
    // Predicated region
    $region30: #{diffusion_embedding_forward.1} parent=1 // pred_check
      _
    $region31: #{diffusion_embedding_forward.1} parent=1 // pred_check_branch
      %53 = sbr.rel (0) target = $region33
    $region32: #{diffusion_embedding_forward.1} parent=1 // pred_region
      %55 = dma.done [#allocation6], 16384
    $region33: #{diffusion_embedding_forward.1} parent=1 // pred_fallthru
      _
    %v56 = vld [vmem:[%s0] sm:$0xff]
    %v57 = vfloor.f32 %v56
    %v58 = vsub.f32 %v56, %v57
    %v59 = vcvt.f32.s32.to.zero.pseudo %v57
    %v60 = vceil.f32 %v56
    %v61 = vcvt.f32.s32.to.zero.pseudo %v60
    %v62 = vlaneseq
    %v63 = vand.u32 %v62, 127
    %64 = vset.pattern.permute.xlu0 0
    %65 = vperm.xlu0 %64, %v59
    %v66 = vpop.permute.xlu0 %65
    %vm67 = vcmp.eq.s32.totalorder %v63, %v66
    %v68 = vsub.f32 1.0, %v58
    %70 = vset.pattern.permute.xlu0 0
    %71 = vperm.xlu0 %70, %v68
    %v72 = vpop.permute.xlu0 %71
    %v74 = vsel %vm67, %v72, 0.0
    %75 = vset.pattern.permute.xlu0 0
    %76 = vperm.xlu0 %75, %v61
    %v77 = vpop.permute.xlu0 %76
    %vm78 = vcmp.eq.s32.totalorder %v63, %v77
    %80 = vset.pattern.permute.xlu0 0
    %81 = vperm.xlu0 %80, %v58
    %v82 = vpop.permute.xlu0 %81
    %v84 = vsel %vm78, %v82, 0.0
    %v85 = vadd.f32 %v74, %v84
    %v86 = vld [vmem:[%s1] sm:$0xff]
    %v87 = vld [vmem:[%s1 + $0x8] sm:$0xff]
    %v88 = vld [vmem:[%s1 + $0x10] sm:$0xff]
    %v89 = vld [vmem:[%s1 + $0x18] sm:$0xff]
    %v90 = vld [vmem:[%s1 + $0x20] sm:$0xff]
    %v91 = vld [vmem:[%s1 + $0x28] sm:$0xff]
    %v92 = vld [vmem:[%s1 + $0x30] sm:$0xff]
    %v93 = vld [vmem:[%s1 + $0x38] sm:$0xff]
    %v94 = vld [vmem:[%s1 + $0x40] sm:$0xff]
    %v95 = vld [vmem:[%s1 + $0x48] sm:$0xff]
    %v96 = vld [vmem:[%s1 + $0x50] sm:$0xff]
    %v97 = vld [vmem:[%s1 + $0x58] sm:$0xff]
    %v98 = vld [vmem:[%s1 + $0x60] sm:$0xff]
    %v99 = vld [vmem:[%s1 + $0x68] sm:$0xff]
    %v100 = vld [vmem:[%s1 + $0x70] sm:$0xff]
    %v101 = vld [vmem:[%s1 + $0x78] sm:$0xff]
    %102 = vmatpush.msra.mxu0 %v101
    %103 = vmatpush.msra.mxu0 %v100
    %104 = vmatpush.msra.mxu0 %v99
    %105 = vmatpush.msra.mxu0 %v98
    %106 = vmatpush.msra.mxu0 %v97
    %107 = vmatpush.msra.mxu0 %v96
    %108 = vmatpush.msra.mxu0 %v95
    %109 = vmatpush.msra.mxu0 %v94
    %110 = vmatpush.msra.mxu0 %v93
    %111 = vmatpush.msra.mxu0 %v92
    %112 = vmatpush.msra.mxu0 %v91
    %113 = vmatpush.msra.mxu0 %v90
    %114 = vmatpush.msra.mxu0 %v89
    %115 = vmatpush.msra.mxu0 %v88
    %116 = vmatpush.msra.mxu0 %v87
    %117 = vmatpush.msra.mxu0 %v86
    %118 = vmatmul.f32.gmra.mxu0 %v85
    %v119 = vpop.f32.mrf.mxu0
    %v120 = vadd.f32 0.0, %v119
    %121 = vdwg.mxu0
    %v122 = vpack.c.bf16 %v120, %v120
    %v123 = vld [vmem:[#allocation2] sm:$0xff]
    %v124 = vld [vmem:[#allocation2 + $0x8] sm:$0xff]
    %v125 = vld [vmem:[#allocation2 + $0x10] sm:$0xff]
    %v126 = vld [vmem:[#allocation2 + $0x18] sm:$0xff]
    %v127 = vld [vmem:[#allocation2 + $0x20] sm:$0xff]
    %v128 = vld [vmem:[#allocation2 + $0x28] sm:$0xff]
    %v129 = vld [vmem:[#allocation2 + $0x30] sm:$0xff]
    %v130 = vld [vmem:[#allocation2 + $0x38] sm:$0xff]
    %v131 = vld [vmem:[#allocation2 + $0x40] sm:$0xff]
    %v132 = vld [vmem:[#allocation2 + $0x48] sm:$0xff]
    %v133 = vld [vmem:[#allocation2 + $0x50] sm:$0xff]
    %v134 = vld [vmem:[#allocation2 + $0x58] sm:$0xff]
    %v135 = vld [vmem:[#allocation2 + $0x60] sm:$0xff]
    %v136 = vld [vmem:[#allocation2 + $0x68] sm:$0xff]
    %v137 = vld [vmem:[#allocation2 + $0x70] sm:$0xff]
    %v138 = vld [vmem:[#allocation2 + $0x78] sm:$0xff]
    %v139 = vld [vmem:[#allocation2 + $0x80] sm:$0xff]
    %v140 = vld [vmem:[#allocation2 + $0x88] sm:$0xff]
    %v141 = vld [vmem:[#allocation2 + $0x90] sm:$0xff]
    %v142 = vld [vmem:[#allocation2 + $0x98] sm:$0xff]
    %v143 = vld [vmem:[#allocation2 + $0xa0] sm:$0xff]
    %v144 = vld [vmem:[#allocation2 + $0xa8] sm:$0xff]
    %v145 = vld [vmem:[#allocation2 + $0xb0] sm:$0xff]
    %v146 = vld [vmem:[#allocation2 + $0xb8] sm:$0xff]
    %v147 = vld [vmem:[#allocation2 + $0xc0] sm:$0xff]
    %v148 = vld [vmem:[#allocation2 + $0xc8] sm:$0xff]
    %v149 = vld [vmem:[#allocation2 + $0xd0] sm:$0xff]
    %v150 = vld [vmem:[#allocation2 + $0xd8] sm:$0xff]
    %v151 = vld [vmem:[#allocation2 + $0xe0] sm:$0xff]
    %v152 = vld [vmem:[#allocation2 + $0xe8] sm:$0xff]
    %v153 = vld [vmem:[#allocation2 + $0xf0] sm:$0xff]
    %v154 = vld [vmem:[#allocation2 + $0xf8] sm:$0xff]
    %v155 = vld [vmem:[%s3] sm:$0xf]
    %v157 = vperm.slane %v155, 0
    %v158 = vperm.slane %v155, 1
    %v159 = vperm.slane %v155, 2
    %v160 = vperm.slane %v155, 3
    %v197 = vunpack.c.l.b16 %v123
    %v198 = vunpack.c.h.b16 %v123
    %v199 = vunpack.c.l.b16 %v124
    %v200 = vunpack.c.h.b16 %v124
    %v201 = vunpack.c.l.b16 %v125
    %v202 = vunpack.c.h.b16 %v125
    %v203 = vunpack.c.l.b16 %v126
    %v204 = vunpack.c.h.b16 %v126
    %v205 = vunpack.c.l.b16 %v127
    %v206 = vunpack.c.h.b16 %v127
    %v207 = vunpack.c.l.b16 %v128
    %v208 = vunpack.c.h.b16 %v128
    %v209 = vunpack.c.l.b16 %v129
    %v210 = vunpack.c.h.b16 %v129
    %v211 = vunpack.c.l.b16 %v130
    %v212 = vunpack.c.h.b16 %v130
    %v213 = vunpack.c.l.b16 %v131
    %v214 = vunpack.c.h.b16 %v131
    %v215 = vunpack.c.l.b16 %v132
    %v216 = vunpack.c.h.b16 %v132
    %v217 = vunpack.c.l.b16 %v133
    %v218 = vunpack.c.h.b16 %v133
    %v219 = vunpack.c.l.b16 %v134
    %v220 = vunpack.c.h.b16 %v134
    %v221 = vunpack.c.l.b16 %v135
    %v222 = vunpack.c.h.b16 %v135
    %v223 = vunpack.c.l.b16 %v136
    %v224 = vunpack.c.h.b16 %v136
    %v225 = vunpack.c.l.b16 %v137
    %v226 = vunpack.c.h.b16 %v137
    %v227 = vunpack.c.l.b16 %v138
    %v228 = vunpack.c.h.b16 %v138
    %v229 = vunpack.c.l.b16 %v139
    %v230 = vunpack.c.h.b16 %v139
    %v231 = vunpack.c.l.b16 %v140
    %v232 = vunpack.c.h.b16 %v140
    %v233 = vunpack.c.l.b16 %v141
    %v234 = vunpack.c.h.b16 %v141
    %v235 = vunpack.c.l.b16 %v142
    %v236 = vunpack.c.h.b16 %v142
    %v237 = vunpack.c.l.b16 %v143
    %v238 = vunpack.c.h.b16 %v143
    %v239 = vunpack.c.l.b16 %v144
    %v240 = vunpack.c.h.b16 %v144
    %v241 = vunpack.c.l.b16 %v145
    %v242 = vunpack.c.h.b16 %v145
    %v243 = vunpack.c.l.b16 %v146
    %v244 = vunpack.c.h.b16 %v146
    %v245 = vunpack.c.l.b16 %v147
    %v246 = vunpack.c.h.b16 %v147
    %v247 = vunpack.c.l.b16 %v148
    %v248 = vunpack.c.h.b16 %v148
    %v249 = vunpack.c.l.b16 %v149
    %v250 = vunpack.c.h.b16 %v149
    %v251 = vunpack.c.l.b16 %v150
    %v252 = vunpack.c.h.b16 %v150
    %v253 = vunpack.c.l.b16 %v151
    %v254 = vunpack.c.h.b16 %v151
    %v255 = vunpack.c.l.b16 %v152
    %v256 = vunpack.c.h.b16 %v152
    %v257 = vunpack.c.l.b16 %v153
    %v258 = vunpack.c.h.b16 %v153
    %v259 = vunpack.c.l.b16 %v154
    %v260 = vunpack.c.h.b16 %v154
    %v261 = vpack.c.b16 %v201, %v197
    %v262 = vpack.c.b16 %v202, %v198
    %v263 = vpack.c.b16 %v203, %v199
    %v264 = vpack.c.b16 %v204, %v200
    %v265 = vpack.c.b16 %v209, %v205
    %v266 = vpack.c.b16 %v210, %v206
    %v267 = vpack.c.b16 %v211, %v207
    %v268 = vpack.c.b16 %v212, %v208
    %v269 = vpack.c.b16 %v217, %v213
    %v270 = vpack.c.b16 %v218, %v214
    %v271 = vpack.c.b16 %v219, %v215
    %v272 = vpack.c.b16 %v220, %v216
    %v273 = vpack.c.b16 %v225, %v221
    %v274 = vpack.c.b16 %v226, %v222
    %v275 = vpack.c.b16 %v227, %v223
    %v276 = vpack.c.b16 %v228, %v224
    %v277 = vpack.c.b16 %v233, %v229
    %v278 = vpack.c.b16 %v234, %v230
    %v279 = vpack.c.b16 %v235, %v231
    %v280 = vpack.c.b16 %v236, %v232
    %v281 = vpack.c.b16 %v241, %v237
    %v282 = vpack.c.b16 %v242, %v238
    %v283 = vpack.c.b16 %v243, %v239
    %v284 = vpack.c.b16 %v244, %v240
    %v285 = vpack.c.b16 %v249, %v245
    %v286 = vpack.c.b16 %v250, %v246
    %v287 = vpack.c.b16 %v251, %v247
    %v288 = vpack.c.b16 %v252, %v248
    %v289 = vpack.c.b16 %v257, %v253
    %v290 = vpack.c.b16 %v258, %v254
    %v291 = vpack.c.b16 %v259, %v255
    %v292 = vpack.c.b16 %v260, %v256
    %325 = vmatpush.bf16.msra.mxu0 %v289
    %326 = vmatpush.bf16.msra.mxu0 %v285
    %327 = vmatpush.bf16.msra.mxu0 %v281
    %328 = vmatpush.bf16.msra.mxu0 %v277
    %329 = vmatpush.bf16.msra.mxu0 %v273
    %330 = vmatpush.bf16.msra.mxu0 %v269
    %331 = vmatpush.bf16.msra.mxu0 %v265
    %332 = vmatpush.bf16.msra.mxu0 %v261
    %333 = vmatmul.bf16.gmra.mxu0 %v122
    %v334 = vpop.f32.mrf.mxu0
    %v335 = vadd.f32 %v157, %v334
    %v336 = vpop.f32.mrf.mxu0
    %337 = vdwg.mxu0
    %338 = vmatpush.bf16.msra.mxu0 %v290
    %339 = vmatpush.bf16.msra.mxu0 %v286
    %340 = vmatpush.bf16.msra.mxu0 %v282
    %341 = vmatpush.bf16.msra.mxu0 %v278
    %342 = vmatpush.bf16.msra.mxu0 %v274
    %343 = vmatpush.bf16.msra.mxu0 %v270
    %344 = vmatpush.bf16.msra.mxu0 %v266
    %345 = vmatpush.bf16.msra.mxu0 %v262
    %346 = vmatmul.bf16.gmra.mxu0 %v122
    %v347 = vpop.f32.mrf.mxu0
    %v348 = vadd.f32 %v158, %v347
    %v349 = vpop.f32.mrf.mxu0
    %350 = vdwg.mxu0
    %351 = vmatpush.bf16.msra.mxu0 %v291
    %352 = vmatpush.bf16.msra.mxu0 %v287
    %353 = vmatpush.bf16.msra.mxu0 %v283
    %354 = vmatpush.bf16.msra.mxu0 %v279
    %355 = vmatpush.bf16.msra.mxu0 %v275
    %356 = vmatpush.bf16.msra.mxu0 %v271
    %357 = vmatpush.bf16.msra.mxu0 %v267
    %358 = vmatpush.bf16.msra.mxu0 %v263
    %359 = vmatmul.bf16.gmra.mxu0 %v122
    %v360 = vpop.f32.mrf.mxu0
    %v361 = vadd.f32 %v159, %v360
    %v362 = vpop.f32.mrf.mxu0
    %363 = vdwg.mxu0
    %364 = vmatpush.bf16.msra.mxu0 %v292
    %365 = vmatpush.bf16.msra.mxu0 %v288
    %366 = vmatpush.bf16.msra.mxu0 %v284
    %367 = vmatpush.bf16.msra.mxu0 %v280
    %368 = vmatpush.bf16.msra.mxu0 %v276
    %369 = vmatpush.bf16.msra.mxu0 %v272
    %370 = vmatpush.bf16.msra.mxu0 %v268
    %371 = vmatpush.bf16.msra.mxu0 %v264
    %372 = vmatmul.bf16.gmra.mxu0 %v122
    %v373 = vpop.f32.mrf.mxu0
    %v374 = vadd.f32 %v160, %v373
    %v375 = vpop.f32.mrf.mxu0
    %376 = vdwg.mxu0
    %v377 = vxor.u32 %v335, 2147483648
    %v378 = vxor.u32 %v348, 2147483648
    %v379 = vxor.u32 %v361, 2147483648
    %v380 = vxor.u32 %v374, 2147483648
    %v381 = vmul.f32 %v377, 1.442695
    %v382 = vpow.pop %v381
    %v383 = vmul.f32 %v378, 1.442695
    %v384 = vpow.pop %v383
    %v385 = vmul.f32 %v379, 1.442695
    %v386 = vpow.pop %v385
    %v387 = vmul.f32 %v380, 1.442695
    %v388 = vpow.pop %v387
    %v389 = vadd.f32 %v382, 1.0
    %v390 = vadd.f32 %v384, 1.0
    %v391 = vadd.f32 %v386, 1.0
    %v392 = vadd.f32 %v388, 1.0
    %v393 = vrcp.pop %v389
    %v394 = vmul.f32 %v389, %v393
    %v395 = vsub.f32 1.0, %v394
    %v396 = vmul.f32 %v393, %v395
    %v397 = vadd.f32 %v393, %v396
    %vm398 = vweird.f32 %v389
    %vm399 = vweird.f32 %v393
    %vm400 = vmor %vm398, %vm399
    %v401 = vsel %vm400, %v393, %v397
    %v402 = vand.u32 2147483647, %v389
    %vm403 = vcmp.eq.f32.partialorder %v402, 8.507059e+37
    %v404 = vand.u32 %v389, 2147483648
    %v405 = vor.u32 1.1754944e-38, %v404
    %v406 = vsel %vm403, %v405, %v401
    %v407 = vmul.f32 1.0, %v406
    %v408 = vrcp.pop %v390
    %v409 = vmul.f32 %v390, %v408
    %v410 = vsub.f32 1.0, %v409
    %v411 = vmul.f32 %v408, %v410
    %v412 = vadd.f32 %v408, %v411
    %vm413 = vweird.f32 %v390
    %vm414 = vweird.f32 %v408
    %vm415 = vmor %vm413, %vm414
    %v416 = vsel %vm415, %v408, %v412
    %v417 = vand.u32 2147483647, %v390
    %vm418 = vcmp.eq.f32.partialorder %v417, 8.507059e+37
    %v419 = vand.u32 %v390, 2147483648
    %v420 = vor.u32 1.1754944e-38, %v419
    %v421 = vsel %vm418, %v420, %v416
    %v422 = vmul.f32 1.0, %v421
    %v423 = vrcp.pop %v391
    %v424 = vmul.f32 %v391, %v423
    %v425 = vsub.f32 1.0, %v424
    %v426 = vmul.f32 %v423, %v425
    %v427 = vadd.f32 %v423, %v426
    %vm428 = vweird.f32 %v391
    %vm429 = vweird.f32 %v423
    %vm430 = vmor %vm428, %vm429
    %v431 = vsel %vm430, %v423, %v427
    %v432 = vand.u32 2147483647, %v391
    %vm433 = vcmp.eq.f32.partialorder %v432, 8.507059e+37
    %v434 = vand.u32 %v391, 2147483648
    %v435 = vor.u32 1.1754944e-38, %v434
    %v436 = vsel %vm433, %v435, %v431
    %v437 = vmul.f32 1.0, %v436
    %v438 = vrcp.pop %v392
    %v439 = vmul.f32 %v392, %v438
    %v440 = vsub.f32 1.0, %v439
    %v441 = vmul.f32 %v438, %v440
    %v442 = vadd.f32 %v438, %v441
    %vm443 = vweird.f32 %v392
    %vm444 = vweird.f32 %v438
    %vm445 = vmor %vm443, %vm444
    %v446 = vsel %vm445, %v438, %v442
    %v447 = vand.u32 2147483647, %v392
    %vm448 = vcmp.eq.f32.partialorder %v447, 8.507059e+37
    %v449 = vand.u32 %v392, 2147483648
    %v450 = vor.u32 1.1754944e-38, %v449
    %v451 = vsel %vm448, %v450, %v446
    %v452 = vmul.f32 1.0, %v451
    %v453 = vmul.f32 %v335, %v407
    %v454 = vmul.f32 %v348, %v422
    %v455 = vmul.f32 %v361, %v437
    %v456 = vmul.f32 %v374, %v452
    %v457 = vpack.c.bf16 %v453, %v453
    %v458 = vpack.c.bf16 %v454, %v454
    %v459 = vpack.c.bf16 %v455, %v455
    %v460 = vpack.c.bf16 %v456, %v456
    %v461 = vld [vmem:[#allocation5] sm:$0xff]
    %v462 = vld [vmem:[#allocation5 + $0x8] sm:$0xff]
    %v463 = vld [vmem:[#allocation5 + $0x10] sm:$0xff]
    %v464 = vld [vmem:[#allocation5 + $0x18] sm:$0xff]
    %v465 = vld [vmem:[#allocation5 + $0x20] sm:$0xff]
    %v466 = vld [vmem:[#allocation5 + $0x28] sm:$0xff]
    %v467 = vld [vmem:[#allocation5 + $0x30] sm:$0xff]
    %v468 = vld [vmem:[#allocation5 + $0x38] sm:$0xff]
    %v469 = vld [vmem:[#allocation5 + $0x40] sm:$0xff]
    %v470 = vld [vmem:[#allocation5 + $0x48] sm:$0xff]
    %v471 = vld [vmem:[#allocation5 + $0x50] sm:$0xff]
    %v472 = vld [vmem:[#allocation5 + $0x58] sm:$0xff]
    %v473 = vld [vmem:[#allocation5 + $0x60] sm:$0xff]
    %v474 = vld [vmem:[#allocation5 + $0x68] sm:$0xff]
    %v475 = vld [vmem:[#allocation5 + $0x70] sm:$0xff]
    %v476 = vld [vmem:[#allocation5 + $0x78] sm:$0xff]
    %v477 = vld [vmem:[#allocation5 + $0x80] sm:$0xff]
    %v478 = vld [vmem:[#allocation5 + $0x88] sm:$0xff]
    %v479 = vld [vmem:[#allocation5 + $0x90] sm:$0xff]
    %v480 = vld [vmem:[#allocation5 + $0x98] sm:$0xff]
    %v481 = vld [vmem:[#allocation5 + $0xa0] sm:$0xff]
    %v482 = vld [vmem:[#allocation5 + $0xa8] sm:$0xff]
    %v483 = vld [vmem:[#allocation5 + $0xb0] sm:$0xff]
    %v484 = vld [vmem:[#allocation5 + $0xb8] sm:$0xff]
    %v485 = vld [vmem:[#allocation5 + $0xc0] sm:$0xff]
    %v486 = vld [vmem:[#allocation5 + $0xc8] sm:$0xff]
    %v487 = vld [vmem:[#allocation5 + $0xd0] sm:$0xff]
    %v488 = vld [vmem:[#allocation5 + $0xd8] sm:$0xff]
    %v489 = vld [vmem:[#allocation5 + $0xe0] sm:$0xff]
    %v490 = vld [vmem:[#allocation5 + $0xe8] sm:$0xff]
    %v491 = vld [vmem:[#allocation5 + $0xf0] sm:$0xff]
    %v492 = vld [vmem:[#allocation5 + $0xf8] sm:$0xff]
    %v493 = vld [vmem:[#allocation5 + $0x100] sm:$0xff]
    %v494 = vld [vmem:[#allocation5 + $0x108] sm:$0xff]
    %v495 = vld [vmem:[#allocation5 + $0x110] sm:$0xff]
    %v496 = vld [vmem:[#allocation5 + $0x118] sm:$0xff]
    %v497 = vld [vmem:[#allocation5 + $0x120] sm:$0xff]
    %v498 = vld [vmem:[#allocation5 + $0x128] sm:$0xff]
    %v499 = vld [vmem:[#allocation5 + $0x130] sm:$0xff]
    %v500 = vld [vmem:[#allocation5 + $0x138] sm:$0xff]
    %v501 = vld [vmem:[#allocation5 + $0x140] sm:$0xff]
    %v502 = vld [vmem:[#allocation5 + $0x148] sm:$0xff]
    %v503 = vld [vmem:[#allocation5 + $0x150] sm:$0xff]
    %v504 = vld [vmem:[#allocation5 + $0x158] sm:$0xff]
    %v505 = vld [vmem:[#allocation5 + $0x160] sm:$0xff]
    %v506 = vld [vmem:[#allocation5 + $0x168] sm:$0xff]
    %v507 = vld [vmem:[#allocation5 + $0x170] sm:$0xff]
    %v508 = vld [vmem:[#allocation5 + $0x178] sm:$0xff]
    %v509 = vld [vmem:[#allocation5 + $0x180] sm:$0xff]
    %v510 = vld [vmem:[#allocation5 + $0x188] sm:$0xff]
    %v511 = vld [vmem:[#allocation5 + $0x190] sm:$0xff]
    %v512 = vld [vmem:[#allocation5 + $0x198] sm:$0xff]
    %v513 = vld [vmem:[#allocation5 + $0x1a0] sm:$0xff]
    %v514 = vld [vmem:[#allocation5 + $0x1a8] sm:$0xff]
    %v515 = vld [vmem:[#allocation5 + $0x1b0] sm:$0xff]
    %v516 = vld [vmem:[#allocation5 + $0x1b8] sm:$0xff]
    %v517 = vld [vmem:[#allocation5 + $0x1c0] sm:$0xff]
    %v518 = vld [vmem:[#allocation5 + $0x1c8] sm:$0xff]
    %v519 = vld [vmem:[#allocation5 + $0x1d0] sm:$0xff]
    %v520 = vld [vmem:[#allocation5 + $0x1d8] sm:$0xff]
    %v521 = vld [vmem:[#allocation5 + $0x1e0] sm:$0xff]
    %v522 = vld [vmem:[#allocation5 + $0x1e8] sm:$0xff]
    %v523 = vld [vmem:[#allocation5 + $0x1f0] sm:$0xff]
    %v524 = vld [vmem:[#allocation5 + $0x1f8] sm:$0xff]
    %v525 = vld [vmem:[#allocation5 + $0x200] sm:$0xff]
    %v526 = vld [vmem:[#allocation5 + $0x208] sm:$0xff]
    %v527 = vld [vmem:[#allocation5 + $0x210] sm:$0xff]
    %v528 = vld [vmem:[#allocation5 + $0x218] sm:$0xff]
    %v529 = vld [vmem:[#allocation5 + $0x220] sm:$0xff]
    %v530 = vld [vmem:[#allocation5 + $0x228] sm:$0xff]
    %v531 = vld [vmem:[#allocation5 + $0x230] sm:$0xff]
    %v532 = vld [vmem:[#allocation5 + $0x238] sm:$0xff]
    %v533 = vld [vmem:[#allocation5 + $0x240] sm:$0xff]
    %v534 = vld [vmem:[#allocation5 + $0x248] sm:$0xff]
    %v535 = vld [vmem:[#allocation5 + $0x250] sm:$0xff]
    %v536 = vld [vmem:[#allocation5 + $0x258] sm:$0xff]
    %v537 = vld [vmem:[#allocation5 + $0x260] sm:$0xff]
    %v538 = vld [vmem:[#allocation5 + $0x268] sm:$0xff]
    %v539 = vld [vmem:[#allocation5 + $0x270] sm:$0xff]
    %v540 = vld [vmem:[#allocation5 + $0x278] sm:$0xff]
    %v541 = vld [vmem:[#allocation5 + $0x280] sm:$0xff]
    %v542 = vld [vmem:[#allocation5 + $0x288] sm:$0xff]
    %v543 = vld [vmem:[#allocation5 + $0x290] sm:$0xff]
    %v544 = vld [vmem:[#allocation5 + $0x298] sm:$0xff]
    %v545 = vld [vmem:[#allocation5 + $0x2a0] sm:$0xff]
    %v546 = vld [vmem:[#allocation5 + $0x2a8] sm:$0xff]
    %v547 = vld [vmem:[#allocation5 + $0x2b0] sm:$0xff]
    %v548 = vld [vmem:[#allocation5 + $0x2b8] sm:$0xff]
    %v549 = vld [vmem:[#allocation5 + $0x2c0] sm:$0xff]
    %v550 = vld [vmem:[#allocation5 + $0x2c8] sm:$0xff]
    %v551 = vld [vmem:[#allocation5 + $0x2d0] sm:$0xff]
    %v552 = vld [vmem:[#allocation5 + $0x2d8] sm:$0xff]
    %v553 = vld [vmem:[#allocation5 + $0x2e0] sm:$0xff]
    %v554 = vld [vmem:[#allocation5 + $0x2e8] sm:$0xff]
    %v555 = vld [vmem:[#allocation5 + $0x2f0] sm:$0xff]
    %v556 = vld [vmem:[#allocation5 + $0x2f8] sm:$0xff]
    %v557 = vld [vmem:[#allocation5 + $0x300] sm:$0xff]
    %v558 = vld [vmem:[#allocation5 + $0x308] sm:$0xff]
    %v559 = vld [vmem:[#allocation5 + $0x310] sm:$0xff]
    %v560 = vld [vmem:[#allocation5 + $0x318] sm:$0xff]
    %v561 = vld [vmem:[#allocation5 + $0x320] sm:$0xff]
    %v562 = vld [vmem:[#allocation5 + $0x328] sm:$0xff]
    %v563 = vld [vmem:[#allocation5 + $0x330] sm:$0xff]
    %v564 = vld [vmem:[#allocation5 + $0x338] sm:$0xff]
    %v565 = vld [vmem:[#allocation5 + $0x340] sm:$0xff]
    %v566 = vld [vmem:[#allocation5 + $0x348] sm:$0xff]
    %v567 = vld [vmem:[#allocation5 + $0x350] sm:$0xff]
    %v568 = vld [vmem:[#allocation5 + $0x358] sm:$0xff]
    %v569 = vld [vmem:[#allocation5 + $0x360] sm:$0xff]
    %v570 = vld [vmem:[#allocation5 + $0x368] sm:$0xff]
    %v571 = vld [vmem:[#allocation5 + $0x370] sm:$0xff]
    %v572 = vld [vmem:[#allocation5 + $0x378] sm:$0xff]
    %v573 = vld [vmem:[#allocation5 + $0x380] sm:$0xff]
    %v574 = vld [vmem:[#allocation5 + $0x388] sm:$0xff]
    %v575 = vld [vmem:[#allocation5 + $0x390] sm:$0xff]
    %v576 = vld [vmem:[#allocation5 + $0x398] sm:$0xff]
    %v577 = vld [vmem:[#allocation5 + $0x3a0] sm:$0xff]
    %v578 = vld [vmem:[#allocation5 + $0x3a8] sm:$0xff]
    %v579 = vld [vmem:[#allocation5 + $0x3b0] sm:$0xff]
    %v580 = vld [vmem:[#allocation5 + $0x3b8] sm:$0xff]
    %v581 = vld [vmem:[#allocation5 + $0x3c0] sm:$0xff]
    %v582 = vld [vmem:[#allocation5 + $0x3c8] sm:$0xff]
    %v583 = vld [vmem:[#allocation5 + $0x3d0] sm:$0xff]
    %v584 = vld [vmem:[#allocation5 + $0x3d8] sm:$0xff]
    %v585 = vld [vmem:[#allocation5 + $0x3e0] sm:$0xff]
    %v586 = vld [vmem:[#allocation5 + $0x3e8] sm:$0xff]
    %v587 = vld [vmem:[#allocation5 + $0x3f0] sm:$0xff]
    %v588 = vld [vmem:[#allocation5 + $0x3f8] sm:$0xff]
    %v589 = vld [vmem:[%s5] sm:$0xf]
    %v591 = vperm.slane %v589, 0
    %v592 = vperm.slane %v589, 1
    %v593 = vperm.slane %v589, 2
    %v594 = vperm.slane %v589, 3
    %v727 = vunpack.c.l.b16 %v461
    %v728 = vunpack.c.h.b16 %v461
    %v729 = vunpack.c.l.b16 %v462
    %v730 = vunpack.c.h.b16 %v462
    %v731 = vunpack.c.l.b16 %v463
    %v732 = vunpack.c.h.b16 %v463
    %v733 = vunpack.c.l.b16 %v464
    %v734 = vunpack.c.h.b16 %v464
    %v735 = vunpack.c.l.b16 %v465
    %v736 = vunpack.c.h.b16 %v465
    %v737 = vunpack.c.l.b16 %v466
    %v738 = vunpack.c.h.b16 %v466
    %v739 = vunpack.c.l.b16 %v467
    %v740 = vunpack.c.h.b16 %v467
    %v741 = vunpack.c.l.b16 %v468
    %v742 = vunpack.c.h.b16 %v468
    %v743 = vunpack.c.l.b16 %v469
    %v744 = vunpack.c.h.b16 %v469
    %v745 = vunpack.c.l.b16 %v470
    %v746 = vunpack.c.h.b16 %v470
    %v747 = vunpack.c.l.b16 %v471
    %v748 = vunpack.c.h.b16 %v471
    %v749 = vunpack.c.l.b16 %v472
    %v750 = vunpack.c.h.b16 %v472
    %v751 = vunpack.c.l.b16 %v473
    %v752 = vunpack.c.h.b16 %v473
    %v753 = vunpack.c.l.b16 %v474
    %v754 = vunpack.c.h.b16 %v474
    %v755 = vunpack.c.l.b16 %v475
    %v756 = vunpack.c.h.b16 %v475
    %v757 = vunpack.c.l.b16 %v476
    %v758 = vunpack.c.h.b16 %v476
    %v759 = vunpack.c.l.b16 %v477
    %v760 = vunpack.c.h.b16 %v477
    %v761 = vunpack.c.l.b16 %v478
    %v762 = vunpack.c.h.b16 %v478
    %v763 = vunpack.c.l.b16 %v479
    %v764 = vunpack.c.h.b16 %v479
    %v765 = vunpack.c.l.b16 %v480
    %v766 = vunpack.c.h.b16 %v480
    %v767 = vunpack.c.l.b16 %v481
    %v768 = vunpack.c.h.b16 %v481
    %v769 = vunpack.c.l.b16 %v482
    %v770 = vunpack.c.h.b16 %v482
    %v771 = vunpack.c.l.b16 %v483
    %v772 = vunpack.c.h.b16 %v483
    %v773 = vunpack.c.l.b16 %v484
    %v774 = vunpack.c.h.b16 %v484
    %v775 = vunpack.c.l.b16 %v485
    %v776 = vunpack.c.h.b16 %v485
    %v777 = vunpack.c.l.b16 %v486
    %v778 = vunpack.c.h.b16 %v486
    %v779 = vunpack.c.l.b16 %v487
    %v780 = vunpack.c.h.b16 %v487
    %v781 = vunpack.c.l.b16 %v488
    %v782 = vunpack.c.h.b16 %v488
    %v783 = vunpack.c.l.b16 %v489
    %v784 = vunpack.c.h.b16 %v489
    %v785 = vunpack.c.l.b16 %v490
    %v786 = vunpack.c.h.b16 %v490
    %v787 = vunpack.c.l.b16 %v491
    %v788 = vunpack.c.h.b16 %v491
    %v789 = vunpack.c.l.b16 %v492
    %v790 = vunpack.c.h.b16 %v492
    %v791 = vunpack.c.l.b16 %v493
    %v792 = vunpack.c.h.b16 %v493
    %v793 = vunpack.c.l.b16 %v494
    %v794 = vunpack.c.h.b16 %v494
    %v795 = vunpack.c.l.b16 %v495
    %v796 = vunpack.c.h.b16 %v495
    %v797 = vunpack.c.l.b16 %v496
    %v798 = vunpack.c.h.b16 %v496
    %v799 = vunpack.c.l.b16 %v497
    %v800 = vunpack.c.h.b16 %v497
    %v801 = vunpack.c.l.b16 %v498
    %v802 = vunpack.c.h.b16 %v498
    %v803 = vunpack.c.l.b16 %v499
    %v804 = vunpack.c.h.b16 %v499
    %v805 = vunpack.c.l.b16 %v500
    %v806 = vunpack.c.h.b16 %v500
    %v807 = vunpack.c.l.b16 %v501
    %v808 = vunpack.c.h.b16 %v501
    %v809 = vunpack.c.l.b16 %v502
    %v810 = vunpack.c.h.b16 %v502
    %v811 = vunpack.c.l.b16 %v503
    %v812 = vunpack.c.h.b16 %v503
    %v813 = vunpack.c.l.b16 %v504
    %v814 = vunpack.c.h.b16 %v504
    %v815 = vunpack.c.l.b16 %v505
    %v816 = vunpack.c.h.b16 %v505
    %v817 = vunpack.c.l.b16 %v506
    %v818 = vunpack.c.h.b16 %v506
    %v819 = vunpack.c.l.b16 %v507
    %v820 = vunpack.c.h.b16 %v507
    %v821 = vunpack.c.l.b16 %v508
    %v822 = vunpack.c.h.b16 %v508
    %v823 = vunpack.c.l.b16 %v509
    %v824 = vunpack.c.h.b16 %v509
    %v825 = vunpack.c.l.b16 %v510
    %v826 = vunpack.c.h.b16 %v510
    %v827 = vunpack.c.l.b16 %v511
    %v828 = vunpack.c.h.b16 %v511
    %v829 = vunpack.c.l.b16 %v512
    %v830 = vunpack.c.h.b16 %v512
    %v831 = vunpack.c.l.b16 %v513
    %v832 = vunpack.c.h.b16 %v513
    %v833 = vunpack.c.l.b16 %v514
    %v834 = vunpack.c.h.b16 %v514
    %v835 = vunpack.c.l.b16 %v515
    %v836 = vunpack.c.h.b16 %v515
    %v837 = vunpack.c.l.b16 %v516
    %v838 = vunpack.c.h.b16 %v516
    %v839 = vunpack.c.l.b16 %v517
    %v840 = vunpack.c.h.b16 %v517
    %v841 = vunpack.c.l.b16 %v518
    %v842 = vunpack.c.h.b16 %v518
    %v843 = vunpack.c.l.b16 %v519
    %v844 = vunpack.c.h.b16 %v519
    %v845 = vunpack.c.l.b16 %v520
    %v846 = vunpack.c.h.b16 %v520
    %v847 = vunpack.c.l.b16 %v521
    %v848 = vunpack.c.h.b16 %v521
    %v849 = vunpack.c.l.b16 %v522
    %v850 = vunpack.c.h.b16 %v522
    %v851 = vunpack.c.l.b16 %v523
    %v852 = vunpack.c.h.b16 %v523
    %v853 = vunpack.c.l.b16 %v524
    %v854 = vunpack.c.h.b16 %v524
    %v855 = vunpack.c.l.b16 %v525
    %v856 = vunpack.c.h.b16 %v525
    %v857 = vunpack.c.l.b16 %v526
    %v858 = vunpack.c.h.b16 %v526
    %v859 = vunpack.c.l.b16 %v527
    %v860 = vunpack.c.h.b16 %v527
    %v861 = vunpack.c.l.b16 %v528
    %v862 = vunpack.c.h.b16 %v528
    %v863 = vunpack.c.l.b16 %v529
    %v864 = vunpack.c.h.b16 %v529
    %v865 = vunpack.c.l.b16 %v530
    %v866 = vunpack.c.h.b16 %v530
    %v867 = vunpack.c.l.b16 %v531
    %v868 = vunpack.c.h.b16 %v531
    %v869 = vunpack.c.l.b16 %v532
    %v870 = vunpack.c.h.b16 %v532
    %v871 = vunpack.c.l.b16 %v533
    %v872 = vunpack.c.h.b16 %v533
    %v873 = vunpack.c.l.b16 %v534
    %v874 = vunpack.c.h.b16 %v534
    %v875 = vunpack.c.l.b16 %v535
    %v876 = vunpack.c.h.b16 %v535
    %v877 = vunpack.c.l.b16 %v536
    %v878 = vunpack.c.h.b16 %v536
    %v879 = vunpack.c.l.b16 %v537
    %v880 = vunpack.c.h.b16 %v537
    %v881 = vunpack.c.l.b16 %v538
    %v882 = vunpack.c.h.b16 %v538
    %v883 = vunpack.c.l.b16 %v539
    %v884 = vunpack.c.h.b16 %v539
    %v885 = vunpack.c.l.b16 %v540
    %v886 = vunpack.c.h.b16 %v540
    %v887 = vunpack.c.l.b16 %v541
    %v888 = vunpack.c.h.b16 %v541
    %v889 = vunpack.c.l.b16 %v542
    %v890 = vunpack.c.h.b16 %v542
    %v891 = vunpack.c.l.b16 %v543
    %v892 = vunpack.c.h.b16 %v543
    %v893 = vunpack.c.l.b16 %v544
    %v894 = vunpack.c.h.b16 %v544
    %v895 = vunpack.c.l.b16 %v545
    %v896 = vunpack.c.h.b16 %v545
    %v897 = vunpack.c.l.b16 %v546
    %v898 = vunpack.c.h.b16 %v546
    %v899 = vunpack.c.l.b16 %v547
    %v900 = vunpack.c.h.b16 %v547
    %v901 = vunpack.c.l.b16 %v548
    %v902 = vunpack.c.h.b16 %v548
    %v903 = vunpack.c.l.b16 %v549
    %v904 = vunpack.c.h.b16 %v549
    %v905 = vunpack.c.l.b16 %v550
    %v906 = vunpack.c.h.b16 %v550
    %v907 = vunpack.c.l.b16 %v551
    %v908 = vunpack.c.h.b16 %v551
    %v909 = vunpack.c.l.b16 %v552
    %v910 = vunpack.c.h.b16 %v552
    %v911 = vunpack.c.l.b16 %v553
    %v912 = vunpack.c.h.b16 %v553
    %v913 = vunpack.c.l.b16 %v554
    %v914 = vunpack.c.h.b16 %v554
    %v915 = vunpack.c.l.b16 %v555
    %v916 = vunpack.c.h.b16 %v555
    %v917 = vunpack.c.l.b16 %v556
    %v918 = vunpack.c.h.b16 %v556
    %v919 = vunpack.c.l.b16 %v557
    %v920 = vunpack.c.h.b16 %v557
    %v921 = vunpack.c.l.b16 %v558
    %v922 = vunpack.c.h.b16 %v558
    %v923 = vunpack.c.l.b16 %v559
    %v924 = vunpack.c.h.b16 %v559
    %v925 = vunpack.c.l.b16 %v560
    %v926 = vunpack.c.h.b16 %v560
    %v927 = vunpack.c.l.b16 %v561
    %v928 = vunpack.c.h.b16 %v561
    %v929 = vunpack.c.l.b16 %v562
    %v930 = vunpack.c.h.b16 %v562
    %v931 = vunpack.c.l.b16 %v563
    %v932 = vunpack.c.h.b16 %v563
    %v933 = vunpack.c.l.b16 %v564
    %v934 = vunpack.c.h.b16 %v564
    %v935 = vunpack.c.l.b16 %v565
    %v936 = vunpack.c.h.b16 %v565
    %v937 = vunpack.c.l.b16 %v566
    %v938 = vunpack.c.h.b16 %v566
    %v939 = vunpack.c.l.b16 %v567
    %v940 = vunpack.c.h.b16 %v567
    %v941 = vunpack.c.l.b16 %v568
    %v942 = vunpack.c.h.b16 %v568
    %v943 = vunpack.c.l.b16 %v569
    %v944 = vunpack.c.h.b16 %v569
    %v945 = vunpack.c.l.b16 %v570
    %v946 = vunpack.c.h.b16 %v570
    %v947 = vunpack.c.l.b16 %v571
    %v948 = vunpack.c.h.b16 %v571
    %v949 = vunpack.c.l.b16 %v572
    %v950 = vunpack.c.h.b16 %v572
    %v951 = vunpack.c.l.b16 %v573
    %v952 = vunpack.c.h.b16 %v573
    %v953 = vunpack.c.l.b16 %v574
    %v954 = vunpack.c.h.b16 %v574
    %v955 = vunpack.c.l.b16 %v575
    %v956 = vunpack.c.h.b16 %v575
    %v957 = vunpack.c.l.b16 %v576
    %v958 = vunpack.c.h.b16 %v576
    %v959 = vunpack.c.l.b16 %v577
    %v960 = vunpack.c.h.b16 %v577
    %v961 = vunpack.c.l.b16 %v578
    %v962 = vunpack.c.h.b16 %v578
    %v963 = vunpack.c.l.b16 %v579
    %v964 = vunpack.c.h.b16 %v579
    %v965 = vunpack.c.l.b16 %v580
    %v966 = vunpack.c.h.b16 %v580
    %v967 = vunpack.c.l.b16 %v581
    %v968 = vunpack.c.h.b16 %v581
    %v969 = vunpack.c.l.b16 %v582
    %v970 = vunpack.c.h.b16 %v582
    %v971 = vunpack.c.l.b16 %v583
    %v972 = vunpack.c.h.b16 %v583
    %v973 = vunpack.c.l.b16 %v584
    %v974 = vunpack.c.h.b16 %v584
    %v975 = vunpack.c.l.b16 %v585
    %v976 = vunpack.c.h.b16 %v585
    %v977 = vunpack.c.l.b16 %v586
    %v978 = vunpack.c.h.b16 %v586
    %v979 = vunpack.c.l.b16 %v587
    %v980 = vunpack.c.h.b16 %v587
    %v981 = vunpack.c.l.b16 %v588
    %v982 = vunpack.c.h.b16 %v588
    %v983 = vpack.c.b16 %v731, %v727
    %v984 = vpack.c.b16 %v732, %v728
    %v985 = vpack.c.b16 %v733, %v729
    %v986 = vpack.c.b16 %v734, %v730
    %v987 = vpack.c.b16 %v739, %v735
    %v988 = vpack.c.b16 %v740, %v736
    %v989 = vpack.c.b16 %v741, %v737
    %v990 = vpack.c.b16 %v742, %v738
    %v991 = vpack.c.b16 %v747, %v743
    %v992 = vpack.c.b16 %v748, %v744
    %v993 = vpack.c.b16 %v749, %v745
    %v994 = vpack.c.b16 %v750, %v746
    %v995 = vpack.c.b16 %v755, %v751
    %v996 = vpack.c.b16 %v756, %v752
    %v997 = vpack.c.b16 %v757, %v753
    %v998 = vpack.c.b16 %v758, %v754
    %v999 = vpack.c.b16 %v763, %v759
    %v1000 = vpack.c.b16 %v764, %v760
    %v1001 = vpack.c.b16 %v765, %v761
    %v1002 = vpack.c.b16 %v766, %v762
    %v1003 = vpack.c.b16 %v771, %v767
    %v1004 = vpack.c.b16 %v772, %v768
    %v1005 = vpack.c.b16 %v773, %v769
    %v1006 = vpack.c.b16 %v774, %v770
    %v1007 = vpack.c.b16 %v779, %v775
    %v1008 = vpack.c.b16 %v780, %v776
    %v1009 = vpack.c.b16 %v781, %v777
    %v1010 = vpack.c.b16 %v782, %v778
    %v1011 = vpack.c.b16 %v787, %v783
    %v1012 = vpack.c.b16 %v788, %v784
    %v1013 = vpack.c.b16 %v789, %v785
    %v1014 = vpack.c.b16 %v790, %v786
    %v1015 = vpack.c.b16 %v795, %v791
    %v1016 = vpack.c.b16 %v796, %v792
    %v1017 = vpack.c.b16 %v797, %v793
    %v1018 = vpack.c.b16 %v798, %v794
    %v1019 = vpack.c.b16 %v803, %v799
    %v1020 = vpack.c.b16 %v804, %v800
    %v1021 = vpack.c.b16 %v805, %v801
    %v1022 = vpack.c.b16 %v806, %v802
    %v1023 = vpack.c.b16 %v811, %v807
    %v1024 = vpack.c.b16 %v812, %v808
    %v1025 = vpack.c.b16 %v813, %v809
    %v1026 = vpack.c.b16 %v814, %v810
    %v1027 = vpack.c.b16 %v819, %v815
    %v1028 = vpack.c.b16 %v820, %v816
    %v1029 = vpack.c.b16 %v821, %v817
    %v1030 = vpack.c.b16 %v822, %v818
    %v1031 = vpack.c.b16 %v827, %v823
    %v1032 = vpack.c.b16 %v828, %v824
    %v1033 = vpack.c.b16 %v829, %v825
    %v1034 = vpack.c.b16 %v830, %v826
    %v1035 = vpack.c.b16 %v835, %v831
    %v1036 = vpack.c.b16 %v836, %v832
    %v1037 = vpack.c.b16 %v837, %v833
    %v1038 = vpack.c.b16 %v838, %v834
    %v1039 = vpack.c.b16 %v843, %v839
    %v1040 = vpack.c.b16 %v844, %v840
    %v1041 = vpack.c.b16 %v845, %v841
    %v1042 = vpack.c.b16 %v846, %v842
    %v1043 = vpack.c.b16 %v851, %v847
    %v1044 = vpack.c.b16 %v852, %v848
    %v1045 = vpack.c.b16 %v853, %v849
    %v1046 = vpack.c.b16 %v854, %v850
    %v1047 = vpack.c.b16 %v859, %v855
    %v1048 = vpack.c.b16 %v860, %v856
    %v1049 = vpack.c.b16 %v861, %v857
    %v1050 = vpack.c.b16 %v862, %v858
    %v1051 = vpack.c.b16 %v867, %v863
    %v1052 = vpack.c.b16 %v868, %v864
    %v1053 = vpack.c.b16 %v869, %v865
    %v1054 = vpack.c.b16 %v870, %v866
    %v1055 = vpack.c.b16 %v875, %v871
    %v1056 = vpack.c.b16 %v876, %v872
    %v1057 = vpack.c.b16 %v877, %v873
    %v1058 = vpack.c.b16 %v878, %v874
    %v1059 = vpack.c.b16 %v883, %v879
    %v1060 = vpack.c.b16 %v884, %v880
    %v1061 = vpack.c.b16 %v885, %v881
    %v1062 = vpack.c.b16 %v886, %v882
    %v1063 = vpack.c.b16 %v891, %v887
    %v1064 = vpack.c.b16 %v892, %v888
    %v1065 = vpack.c.b16 %v893, %v889
    %v1066 = vpack.c.b16 %v894, %v890
    %v1067 = vpack.c.b16 %v899, %v895
    %v1068 = vpack.c.b16 %v900, %v896
    %v1069 = vpack.c.b16 %v901, %v897
    %v1070 = vpack.c.b16 %v902, %v898
    %v1071 = vpack.c.b16 %v907, %v903
    %v1072 = vpack.c.b16 %v908, %v904
    %v1073 = vpack.c.b16 %v909, %v905
    %v1074 = vpack.c.b16 %v910, %v906
    %v1075 = vpack.c.b16 %v915, %v911
    %v1076 = vpack.c.b16 %v916, %v912
    %v1077 = vpack.c.b16 %v917, %v913
    %v1078 = vpack.c.b16 %v918, %v914
    %v1079 = vpack.c.b16 %v923, %v919
    %v1080 = vpack.c.b16 %v924, %v920
    %v1081 = vpack.c.b16 %v925, %v921
    %v1082 = vpack.c.b16 %v926, %v922
    %v1083 = vpack.c.b16 %v931, %v927
    %v1084 = vpack.c.b16 %v932, %v928
    %v1085 = vpack.c.b16 %v933, %v929
    %v1086 = vpack.c.b16 %v934, %v930
    %v1087 = vpack.c.b16 %v939, %v935
    %v1088 = vpack.c.b16 %v940, %v936
    %v1089 = vpack.c.b16 %v941, %v937
    %v1090 = vpack.c.b16 %v942, %v938
    %v1091 = vpack.c.b16 %v947, %v943
    %v1092 = vpack.c.b16 %v948, %v944
    %v1093 = vpack.c.b16 %v949, %v945
    %v1094 = vpack.c.b16 %v950, %v946
    %v1095 = vpack.c.b16 %v955, %v951
    %v1096 = vpack.c.b16 %v956, %v952
    %v1097 = vpack.c.b16 %v957, %v953
    %v1098 = vpack.c.b16 %v958, %v954
    %v1099 = vpack.c.b16 %v963, %v959
    %v1100 = vpack.c.b16 %v964, %v960
    %v1101 = vpack.c.b16 %v965, %v961
    %v1102 = vpack.c.b16 %v966, %v962
    %v1103 = vpack.c.b16 %v971, %v967
    %v1104 = vpack.c.b16 %v972, %v968
    %v1105 = vpack.c.b16 %v973, %v969
    %v1106 = vpack.c.b16 %v974, %v970
    %v1107 = vpack.c.b16 %v979, %v975
    %v1108 = vpack.c.b16 %v980, %v976
    %v1109 = vpack.c.b16 %v981, %v977
    %v1110 = vpack.c.b16 %v982, %v978
    %1239 = vmatpush.bf16.msra.mxu0 %v1011
    %1240 = vmatpush.bf16.msra.mxu0 %v1007
    %1241 = vmatpush.bf16.msra.mxu0 %v1003
    %1242 = vmatpush.bf16.msra.mxu0 %v999
    %1243 = vmatpush.bf16.msra.mxu0 %v995
    %1244 = vmatpush.bf16.msra.mxu0 %v991
    %1245 = vmatpush.bf16.msra.mxu0 %v987
    %1246 = vmatpush.bf16.msra.mxu0 %v983
    %1247 = vmatmul.bf16.gmra.mxu0 %v457
    %v1248 = vpop.f32.mrf.mxu0
    %v1249 = vadd.f32 %v591, %v1248
    %v1250 = vpop.f32.mrf.mxu0
    %1251 = vdwg.mxu0
    %1252 = vmatpush.bf16.msra.mxu0 %v1043
    %1253 = vmatpush.bf16.msra.mxu0 %v1039
    %1254 = vmatpush.bf16.msra.mxu0 %v1035
    %1255 = vmatpush.bf16.msra.mxu0 %v1031
    %1256 = vmatpush.bf16.msra.mxu0 %v1027
    %1257 = vmatpush.bf16.msra.mxu0 %v1023
    %1258 = vmatpush.bf16.msra.mxu0 %v1019
    %1259 = vmatpush.bf16.msra.mxu0 %v1015
    %1260 = vmatmul.bf16.gmra.mxu0 %v458
    %v1261 = vpop.f32.mrf.mxu0
    %v1262 = vadd.f32 %v1249, %v1261
    %v1263 = vpop.f32.mrf.mxu0
    %1264 = vdwg.mxu0
    %1265 = vmatpush.bf16.msra.mxu0 %v1075
    %1266 = vmatpush.bf16.msra.mxu0 %v1071
    %1267 = vmatpush.bf16.msra.mxu0 %v1067
    %1268 = vmatpush.bf16.msra.mxu0 %v1063
    %1269 = vmatpush.bf16.msra.mxu0 %v1059
    %1270 = vmatpush.bf16.msra.mxu0 %v1055
    %1271 = vmatpush.bf16.msra.mxu0 %v1051
    %1272 = vmatpush.bf16.msra.mxu0 %v1047
    %1273 = vmatmul.bf16.gmra.mxu0 %v459
    %v1274 = vpop.f32.mrf.mxu0
    %v1275 = vadd.f32 %v1262, %v1274
    %v1276 = vpop.f32.mrf.mxu0
    %1277 = vdwg.mxu0
    %1278 = vmatpush.bf16.msra.mxu0 %v1107
    %1279 = vmatpush.bf16.msra.mxu0 %v1103
    %1280 = vmatpush.bf16.msra.mxu0 %v1099
    %1281 = vmatpush.bf16.msra.mxu0 %v1095
    %1282 = vmatpush.bf16.msra.mxu0 %v1091
    %1283 = vmatpush.bf16.msra.mxu0 %v1087
    %1284 = vmatpush.bf16.msra.mxu0 %v1083
    %1285 = vmatpush.bf16.msra.mxu0 %v1079
    %1286 = vmatmul.bf16.gmra.mxu0 %v460
    %v1287 = vpop.f32.mrf.mxu0
    %v1288 = vadd.f32 %v1275, %v1287
    %v1289 = vpop.f32.mrf.mxu0
    %1290 = vdwg.mxu0
    %1291 = vmatpush.bf16.msra.mxu0 %v1012
    %1292 = vmatpush.bf16.msra.mxu0 %v1008
    %1293 = vmatpush.bf16.msra.mxu0 %v1004
    %1294 = vmatpush.bf16.msra.mxu0 %v1000
    %1295 = vmatpush.bf16.msra.mxu0 %v996
    %1296 = vmatpush.bf16.msra.mxu0 %v992
    %1297 = vmatpush.bf16.msra.mxu0 %v988
    %1298 = vmatpush.bf16.msra.mxu0 %v984
    %1299 = vmatmul.bf16.gmra.mxu0 %v457
    %v1300 = vpop.f32.mrf.mxu0
    %v1301 = vadd.f32 %v592, %v1300
    %v1302 = vpop.f32.mrf.mxu0
    %1303 = vdwg.mxu0
    %1304 = vmatpush.bf16.msra.mxu0 %v1044
    %1305 = vmatpush.bf16.msra.mxu0 %v1040
    %1306 = vmatpush.bf16.msra.mxu0 %v1036
    %1307 = vmatpush.bf16.msra.mxu0 %v1032
    %1308 = vmatpush.bf16.msra.mxu0 %v1028
    %1309 = vmatpush.bf16.msra.mxu0 %v1024
    %1310 = vmatpush.bf16.msra.mxu0 %v1020
    %1311 = vmatpush.bf16.msra.mxu0 %v1016
    %1312 = vmatmul.bf16.gmra.mxu0 %v458
    %v1313 = vpop.f32.mrf.mxu0
    %v1314 = vadd.f32 %v1301, %v1313
    %v1315 = vpop.f32.mrf.mxu0
    %1316 = vdwg.mxu0
    %1317 = vmatpush.bf16.msra.mxu0 %v1076
    %1318 = vmatpush.bf16.msra.mxu0 %v1072
    %1319 = vmatpush.bf16.msra.mxu0 %v1068
    %1320 = vmatpush.bf16.msra.mxu0 %v1064
    %1321 = vmatpush.bf16.msra.mxu0 %v1060
    %1322 = vmatpush.bf16.msra.mxu0 %v1056
    %1323 = vmatpush.bf16.msra.mxu0 %v1052
    %1324 = vmatpush.bf16.msra.mxu0 %v1048
    %1325 = vmatmul.bf16.gmra.mxu0 %v459
    %v1326 = vpop.f32.mrf.mxu0
    %v1327 = vadd.f32 %v1314, %v1326
    %v1328 = vpop.f32.mrf.mxu0
    %1329 = vdwg.mxu0
    %1330 = vmatpush.bf16.msra.mxu0 %v1108
    %1331 = vmatpush.bf16.msra.mxu0 %v1104
    %1332 = vmatpush.bf16.msra.mxu0 %v1100
    %1333 = vmatpush.bf16.msra.mxu0 %v1096
    %1334 = vmatpush.bf16.msra.mxu0 %v1092
    %1335 = vmatpush.bf16.msra.mxu0 %v1088
    %1336 = vmatpush.bf16.msra.mxu0 %v1084
    %1337 = vmatpush.bf16.msra.mxu0 %v1080
    %1338 = vmatmul.bf16.gmra.mxu0 %v460
    %v1339 = vpop.f32.mrf.mxu0
    %v1340 = vadd.f32 %v1327, %v1339
    %v1341 = vpop.f32.mrf.mxu0
    %1342 = vdwg.mxu0
    %1343 = vmatpush.bf16.msra.mxu0 %v1013
    %1344 = vmatpush.bf16.msra.mxu0 %v1009
    %1345 = vmatpush.bf16.msra.mxu0 %v1005
    %1346 = vmatpush.bf16.msra.mxu0 %v1001
    %1347 = vmatpush.bf16.msra.mxu0 %v997
    %1348 = vmatpush.bf16.msra.mxu0 %v993
    %1349 = vmatpush.bf16.msra.mxu0 %v989
    %1350 = vmatpush.bf16.msra.mxu0 %v985
    %1351 = vmatmul.bf16.gmra.mxu0 %v457
    %v1352 = vpop.f32.mrf.mxu0
    %v1353 = vadd.f32 %v593, %v1352
    %v1354 = vpop.f32.mrf.mxu0
    %1355 = vdwg.mxu0
    %1356 = vmatpush.bf16.msra.mxu0 %v1045
    %1357 = vmatpush.bf16.msra.mxu0 %v1041
    %1358 = vmatpush.bf16.msra.mxu0 %v1037
    %1359 = vmatpush.bf16.msra.mxu0 %v1033
    %1360 = vmatpush.bf16.msra.mxu0 %v1029
    %1361 = vmatpush.bf16.msra.mxu0 %v1025
    %1362 = vmatpush.bf16.msra.mxu0 %v1021
    %1363 = vmatpush.bf16.msra.mxu0 %v1017
    %1364 = vmatmul.bf16.gmra.mxu0 %v458
    %v1365 = vpop.f32.mrf.mxu0
    %v1366 = vadd.f32 %v1353, %v1365
    %v1367 = vpop.f32.mrf.mxu0
    %1368 = vdwg.mxu0
    %1369 = vmatpush.bf16.msra.mxu0 %v1077
    %1370 = vmatpush.bf16.msra.mxu0 %v1073
    %1371 = vmatpush.bf16.msra.mxu0 %v1069
    %1372 = vmatpush.bf16.msra.mxu0 %v1065
    %1373 = vmatpush.bf16.msra.mxu0 %v1061
    %1374 = vmatpush.bf16.msra.mxu0 %v1057
    %1375 = vmatpush.bf16.msra.mxu0 %v1053
    %1376 = vmatpush.bf16.msra.mxu0 %v1049
    %1377 = vmatmul.bf16.gmra.mxu0 %v459
    %v1378 = vpop.f32.mrf.mxu0
    %v1379 = vadd.f32 %v1366, %v1378
    %v1380 = vpop.f32.mrf.mxu0
    %1381 = vdwg.mxu0
    %1382 = vmatpush.bf16.msra.mxu0 %v1109
    %1383 = vmatpush.bf16.msra.mxu0 %v1105
    %1384 = vmatpush.bf16.msra.mxu0 %v1101
    %1385 = vmatpush.bf16.msra.mxu0 %v1097
    %1386 = vmatpush.bf16.msra.mxu0 %v1093
    %1387 = vmatpush.bf16.msra.mxu0 %v1089
    %1388 = vmatpush.bf16.msra.mxu0 %v1085
    %1389 = vmatpush.bf16.msra.mxu0 %v1081
    %1390 = vmatmul.bf16.gmra.mxu0 %v460
    %v1391 = vpop.f32.mrf.mxu0
    %v1392 = vadd.f32 %v1379, %v1391
    %v1393 = vpop.f32.mrf.mxu0
    %1394 = vdwg.mxu0
    %1395 = vmatpush.bf16.msra.mxu0 %v1014
    %1396 = vmatpush.bf16.msra.mxu0 %v1010
    %1397 = vmatpush.bf16.msra.mxu0 %v1006
    %1398 = vmatpush.bf16.msra.mxu0 %v1002
    %1399 = vmatpush.bf16.msra.mxu0 %v998
    %1400 = vmatpush.bf16.msra.mxu0 %v994
    %1401 = vmatpush.bf16.msra.mxu0 %v990
    %1402 = vmatpush.bf16.msra.mxu0 %v986
    %1403 = vmatmul.bf16.gmra.mxu0 %v457
    %v1404 = vpop.f32.mrf.mxu0
    %v1405 = vadd.f32 %v594, %v1404
    %v1406 = vpop.f32.mrf.mxu0
    %1407 = vdwg.mxu0
    %1408 = vmatpush.bf16.msra.mxu0 %v1046
    %1409 = vmatpush.bf16.msra.mxu0 %v1042
    %1410 = vmatpush.bf16.msra.mxu0 %v1038
    %1411 = vmatpush.bf16.msra.mxu0 %v1034
    %1412 = vmatpush.bf16.msra.mxu0 %v1030
    %1413 = vmatpush.bf16.msra.mxu0 %v1026
    %1414 = vmatpush.bf16.msra.mxu0 %v1022
    %1415 = vmatpush.bf16.msra.mxu0 %v1018
    %1416 = vmatmul.bf16.gmra.mxu0 %v458
    %v1417 = vpop.f32.mrf.mxu0
    %v1418 = vadd.f32 %v1405, %v1417
    %v1419 = vpop.f32.mrf.mxu0
    %1420 = vdwg.mxu0
    %1421 = vmatpush.bf16.msra.mxu0 %v1078
    %1422 = vmatpush.bf16.msra.mxu0 %v1074
    %1423 = vmatpush.bf16.msra.mxu0 %v1070
    %1424 = vmatpush.bf16.msra.mxu0 %v1066
    %1425 = vmatpush.bf16.msra.mxu0 %v1062
    %1426 = vmatpush.bf16.msra.mxu0 %v1058
    %1427 = vmatpush.bf16.msra.mxu0 %v1054
    %1428 = vmatpush.bf16.msra.mxu0 %v1050
    %1429 = vmatmul.bf16.gmra.mxu0 %v459
    %v1430 = vpop.f32.mrf.mxu0
    %v1431 = vadd.f32 %v1418, %v1430
    %v1432 = vpop.f32.mrf.mxu0
    %1433 = vdwg.mxu0
    %1434 = vmatpush.bf16.msra.mxu0 %v1110
    %1435 = vmatpush.bf16.msra.mxu0 %v1106
    %1436 = vmatpush.bf16.msra.mxu0 %v1102
    %1437 = vmatpush.bf16.msra.mxu0 %v1098
    %1438 = vmatpush.bf16.msra.mxu0 %v1094
    %1439 = vmatpush.bf16.msra.mxu0 %v1090
    %1440 = vmatpush.bf16.msra.mxu0 %v1086
    %1441 = vmatpush.bf16.msra.mxu0 %v1082
    %1442 = vmatmul.bf16.gmra.mxu0 %v460
    %v1443 = vpop.f32.mrf.mxu0
    %v1444 = vadd.f32 %v1431, %v1443
    %v1445 = vpop.f32.mrf.mxu0
    %1446 = vdwg.mxu0
    %v1447 = vxor.u32 %v1288, 2147483648
    %v1448 = vxor.u32 %v1340, 2147483648
    %v1449 = vxor.u32 %v1392, 2147483648
    %v1450 = vxor.u32 %v1444, 2147483648
    %v1451 = vmul.f32 %v1447, 1.442695
    %v1452 = vpow.pop %v1451
    %v1453 = vmul.f32 %v1448, 1.442695
    %v1454 = vpow.pop %v1453
    %v1455 = vmul.f32 %v1449, 1.442695
    %v1456 = vpow.pop %v1455
    %v1457 = vmul.f32 %v1450, 1.442695
    %v1458 = vpow.pop %v1457
    %v1459 = vadd.f32 %v1452, 1.0
    %v1460 = vadd.f32 %v1454, 1.0
    %v1461 = vadd.f32 %v1456, 1.0
    %v1462 = vadd.f32 %v1458, 1.0
    %v1463 = vrcp.pop %v1459
    %v1464 = vmul.f32 %v1459, %v1463
    %v1465 = vsub.f32 1.0, %v1464
    %v1466 = vmul.f32 %v1463, %v1465
    %v1467 = vadd.f32 %v1463, %v1466
    %vm1468 = vweird.f32 %v1459
    %vm1469 = vweird.f32 %v1463
    %vm1470 = vmor %vm1468, %vm1469
    %v1471 = vsel %vm1470, %v1463, %v1467
    %v1472 = vand.u32 2147483647, %v1459
    %vm1473 = vcmp.eq.f32.partialorder %v1472, 8.507059e+37
    %v1474 = vand.u32 %v1459, 2147483648
    %v1475 = vor.u32 1.1754944e-38, %v1474
    %v1476 = vsel %vm1473, %v1475, %v1471
    %v1477 = vmul.f32 1.0, %v1476
    %v1478 = vrcp.pop %v1460
    %v1479 = vmul.f32 %v1460, %v1478
    %v1480 = vsub.f32 1.0, %v1479
    %v1481 = vmul.f32 %v1478, %v1480
    %v1482 = vadd.f32 %v1478, %v1481
    %vm1483 = vweird.f32 %v1460
    %vm1484 = vweird.f32 %v1478
    %vm1485 = vmor %vm1483, %vm1484
    %v1486 = vsel %vm1485, %v1478, %v1482
    %v1487 = vand.u32 2147483647, %v1460
    %vm1488 = vcmp.eq.f32.partialorder %v1487, 8.507059e+37
    %v1489 = vand.u32 %v1460, 2147483648
    %v1490 = vor.u32 1.1754944e-38, %v1489
    %v1491 = vsel %vm1488, %v1490, %v1486
    %v1492 = vmul.f32 1.0, %v1491
    %v1493 = vrcp.pop %v1461
    %v1494 = vmul.f32 %v1461, %v1493
    %v1495 = vsub.f32 1.0, %v1494
    %v1496 = vmul.f32 %v1493, %v1495
    %v1497 = vadd.f32 %v1493, %v1496
    %vm1498 = vweird.f32 %v1461
    %vm1499 = vweird.f32 %v1493
    %vm1500 = vmor %vm1498, %vm1499
    %v1501 = vsel %vm1500, %v1493, %v1497
    %v1502 = vand.u32 2147483647, %v1461
    %vm1503 = vcmp.eq.f32.partialorder %v1502, 8.507059e+37
    %v1504 = vand.u32 %v1461, 2147483648
    %v1505 = vor.u32 1.1754944e-38, %v1504
    %v1506 = vsel %vm1503, %v1505, %v1501
    %v1507 = vmul.f32 1.0, %v1506
    %v1508 = vrcp.pop %v1462
    %v1509 = vmul.f32 %v1462, %v1508
    %v1510 = vsub.f32 1.0, %v1509
    %v1511 = vmul.f32 %v1508, %v1510
    %v1512 = vadd.f32 %v1508, %v1511
    %vm1513 = vweird.f32 %v1462
    %vm1514 = vweird.f32 %v1508
    %vm1515 = vmor %vm1513, %vm1514
    %v1516 = vsel %vm1515, %v1508, %v1512
    %v1517 = vand.u32 2147483647, %v1462
    %vm1518 = vcmp.eq.f32.partialorder %v1517, 8.507059e+37
    %v1519 = vand.u32 %v1462, 2147483648
    %v1520 = vor.u32 1.1754944e-38, %v1519
    %v1521 = vsel %vm1518, %v1520, %v1516
    %v1522 = vmul.f32 1.0, %v1521
    %v1523 = vmul.f32 %v1288, %v1477
    %v1524 = vmul.f32 %v1340, %v1492
    %v1525 = vmul.f32 %v1392, %v1507
    %v1526 = vmul.f32 %v1444, %v1522
    %1527 = vst [vmem:[#allocation7] sm:$0xff] %v1523
    %1528 = vst [vmem:[#allocation7 + $0x8] sm:$0xff] %v1524
    %1529 = vst [vmem:[#allocation7 + $0x10] sm:$0xff] %v1525
    %1530 = vst [vmem:[#allocation7 + $0x18] sm:$0xff] %v1526
    // Predicated region
    $region34: #{diffusion_embedding_forward.1} parent=1 // pred_check
      _
    $region35: #{diffusion_embedding_forward.1} parent=1 // pred_check_branch
      %1532 = sbr.rel (0) target = $region37
    $region36: #{diffusion_embedding_forward.1} parent=1 // pred_region
      %1534 = vsyncadd [#allocation4], 0
      %s1536 = sshll.u32 [#allocation7], 4
      %s1537 = int_to_ptr.vmem [resolvable:$true] %s1536
      %s1538 = sshll.u32 %s6, 4
      %s1539 = int_to_ptr.hbm [resolvable:$true] %s1538
      %1541 = dma.vmem_to_hbm [thread:$0]  %s1537, 512, %s1539, [#allocation4]
    $region37: #{diffusion_embedding_forward.1} parent=1 // pred_fallthru
      _
    // Predicated region
    $region38: #{diffusion_embedding_forward.1} parent=1 // pred_check
      _
    $region39: #{diffusion_embedding_forward.1} parent=1 // pred_check_branch
      %1543 = sbr.rel (0) target = $region41
    $region40: #{diffusion_embedding_forward.1} parent=1 // pred_region
      %1545 = dma.done [#allocation4], 512
    $region41: #{diffusion_embedding_forward.1} parent=1 // pred_fallthru
      _
    %1546 = vsyncpa [#allocation3], 1
    %1547 = vsyncpa [#allocation6], 1
    %1548 = vsyncpa [#allocation4], 1

</llo_original>
